<compile_context>
chip_gen: v7x
topology: tpu7x:2x2x1
jax: 0.10.0
libtpu: 0.0.40
codegen_flags: <defaults>
</compile_context>

<pallas_src>
import jax
import jax.numpy as jnp
from jax.experimental import pallas as pl
from jax.experimental.pallas import tpu as pltpu

_LANE = 128
_SUBLANE = 8


def _round_up(n, m):
    return ((n + m - 1) // m) * m


# ----------------------------------------------------------------------------
# Kernels
# ----------------------------------------------------------------------------
def _head_math(outraw_f32, alpha, w_fc_bf16, b_fc_f32):
    """PReLU (f32) -> Linear (bf16 MXU, f32 acc) -> log_softmax (f32)."""
    act = jnp.where(outraw_f32 >= 0, outraw_f32, alpha * outraw_f32)
    logits = jnp.dot(act.astype(jnp.bfloat16), w_fc_bf16,
                     preferred_element_type=jnp.float32) + b_fc_f32
    m = jnp.max(logits, axis=-1, keepdims=True)
    z = logits - m
    lse = jnp.log(jnp.sum(jnp.exp(z), axis=-1, keepdims=True))
    return z - lse


def _full_kernel(alpha_ref, x_ref, w_emb_ref, b_emb_ref, w_fc_ref, b_fc_ref,
                 outraw_ref, scores_ref):
    """embedding (flatten+Linear, bf16 MXU) -> PReLU -> fc -> log_softmax."""
    alpha = alpha_ref[0]                       # scalar from SMEM
    outraw = jnp.dot(x_ref[...], w_emb_ref[...],
                     preferred_element_type=jnp.float32) + b_emb_ref[...]
    outraw_ref[...] = outraw
    scores_ref[...] = _head_math(outraw, alpha, w_fc_ref[...], b_fc_ref[...])


def _head_kernel(alpha_ref, outraw_ref, w_fc_ref, b_fc_ref, scores_ref):
    """PReLU -> fc -> log_softmax when the raw embedding is given directly."""
    scores_ref[...] = _head_math(outraw_ref[...], alpha_ref[0],
                                 w_fc_ref[...], b_fc_ref[...])


# ----------------------------------------------------------------------------
# pallas_call wrappers (whole-array VMEM blocks; everything fits easily)
# ----------------------------------------------------------------------------
def _vmem_spec(shape):
    return pl.BlockSpec(shape, lambda: tuple(0 for _ in shape))


_SMEM_SPEC = pl.BlockSpec(memory_space=pltpu.MemorySpace.SMEM)


@jax.jit
def _run_full(alpha, x_flat, w_emb, b_emb, w_fc, b_fc):
    Mp = x_flat.shape[0]
    Ep = w_emb.shape[1]
    Cp = w_fc.shape[1]
    return pl.pallas_call(
        _full_kernel,
        out_shape=(jax.ShapeDtypeStruct((Mp, Ep), jnp.float32),
                   jax.ShapeDtypeStruct((Mp, Cp), jnp.float32)),
        grid=(),
        in_specs=[_SMEM_SPEC,
                  _vmem_spec(x_flat.shape),
                  _vmem_spec(w_emb.shape),
                  _vmem_spec(b_emb.shape),
                  _vmem_spec(w_fc.shape),
                  _vmem_spec(b_fc.shape)],
        out_specs=(_vmem_spec((Mp, Ep)), _vmem_spec((Mp, Cp))),
    )(alpha, x_flat, w_emb, b_emb, w_fc, b_fc)


@jax.jit
def _run_head(alpha, outraw_p, w_fc, b_fc):
    Mp = outraw_p.shape[0]
    Cp = w_fc.shape[1]
    return pl.pallas_call(
        _head_kernel,
        out_shape=jax.ShapeDtypeStruct((Mp, Cp), jnp.float32),
        grid=(),
        in_specs=[_SMEM_SPEC,
                  _vmem_spec(outraw_p.shape),
                  _vmem_spec(w_fc.shape),
                  _vmem_spec(b_fc.shape)],
        out_specs=_vmem_spec((Mp, Cp)),
    )(alpha, outraw_p, w_fc, b_fc)


# ----------------------------------------------------------------------------
# Triplet_ClassNet (Python-level None branching mirrors the PyTorch forward)
# ----------------------------------------------------------------------------
class TripletClassNetPallas:
    def __init__(self, in_features, n_classes, embd_size, key):
        k1, k2, k3, k4 = jax.random.split(key, 4)
        s_emb = 1.0 / jnp.sqrt(jnp.float32(in_features))
        s_fc = 1.0 / jnp.sqrt(jnp.float32(embd_size))

        self.E = embd_size
        self.C = n_classes
        self.Ep = max(_round_up(embd_size, _LANE), _LANE)
        self.Cp = max(_round_up(n_classes, _LANE), _LANE)

        # Unpadded f32 parameters (also used by the reference check).
        self.w_emb = jax.random.uniform(k1, (in_features, embd_size),
                                        jnp.float32, -s_emb, s_emb)
        self.b_emb = jax.random.uniform(k2, (1, embd_size),
                                        jnp.float32, -s_emb, s_emb)
        self.alpha = jnp.full((1,), 0.25, jnp.float32)   # nn.PReLU() default
        self.w_fc = jax.random.uniform(k3, (embd_size, n_classes),
                                       jnp.float32, -s_fc, s_fc)
        self.b_fc = jax.random.uniform(k4, (1, n_classes),
                                       jnp.float32, -s_fc, s_fc)

        # Kernel-side parameters: lane-padded, matmul operands in bf16.
        self.w_emb_p = (jnp.zeros((in_features, self.Ep), jnp.bfloat16)
                        .at[:, :self.E].set(self.w_emb.astype(jnp.bfloat16)))
        self.b_emb_p = (jnp.zeros((1, self.Ep), jnp.float32)
                        .at[:, :self.E].set(self.b_emb))
        self.w_fc_p = (jnp.zeros((self.Ep, self.Cp), jnp.bfloat16)
                       .at[:self.E, :self.C].set(self.w_fc.astype(jnp.bfloat16)))
        # Padded classes get -1e30 bias so they contribute nothing to softmax.
        self.b_fc_p = (jnp.full((1, self.Cp), -1e30, jnp.float32)
                       .at[:, :self.C].set(self.b_fc))

    # ---- helpers ------------------------------------------------------------
    def _flatten(self, x):
        return x.reshape(x.shape[0], -1).astype(jnp.bfloat16)

    def _full(self, x_flat_bf16):
        """Run embedding + head on an already-flattened (M, K) bf16 batch."""
        m = x_flat_bf16.shape[0]
        mp = _round_up(m, _SUBLANE)
        xp = jnp.pad(x_flat_bf16, ((0, mp - m), (0, 0)))
        outraw_p, scores_p = _run_full(self.alpha, xp, self.w_emb_p,
                                       self.b_emb_p, self.w_fc_p, self.b_fc_p)
        return outraw_p[:m, :self.E], scores_p[:m, :self.C]

    def _head(self, outraw_f32):
        """Run PReLU + fc + log_softmax on an (M, E) f32 embedding batch."""
        m = outraw_f32.shape[0]
        mp = _round_up(m, _SUBLANE)
        op = (jnp.zeros((mp, self.Ep), jnp.float32)
              .at[:m, :self.E].set(outraw_f32))
        scores_p = _run_head(self.alpha, op, self.w_fc_p, self.b_fc_p)
        return scores_p[:m, :self.C]

    def _branch(self, x, outraw):
        if x is not None:
            return self._full(self._flatten(x))
        if outraw is None:
            return None, None
        return outraw, self._head(outraw.astype(jnp.float32))

    # ---- forward ------------------------------------------------------------
    def forward(self, x1, x2, outraw1, outraw2):
        # Fused path: both branches supply raw inputs (one kernel, one weight load).
        if x1 is not None and x2 is not None:
            b1 = x1.shape[0]
            x_stack = jnp.concatenate([self._flatten(x1), self._flatten(x2)], axis=0)
            outraw, scores = self._full(x_stack)
            return (outraw[:b1], outraw[b1:], scores[:b1], scores[b1:])

        # Fused head-only path: both branches supply precomputed embeddings.
        if x1 is None and x2 is None and outraw1 is not None and outraw2 is not None:
            b1 = outraw1.shape[0]
            o_stack = jnp.concatenate([outraw1, outraw2], axis=0).astype(jnp.float32)
            scores = self._head(o_stack)
            return (outraw1, outraw2, scores[:b1], scores[b1:])

        # Mixed / partial cases: handle branches independently.
        outraw1, scores1 = self._branch(x1, outraw1)
        outraw2, scores2 = self._branch(x2, outraw2)
        return outraw1, outraw2, scores1, scores2

    def get_embedding(self, x):
        outraw, _ = self._full(self._flatten(x))
        return outraw


# ----------------------------------------------------------------------------
# Reference (plain JAX, same bf16-operand / f32-accumulate recipe as the kernel)
# ----------------------------------------------------------------------------
def _ref_forward(x, w_emb, b_emb, alpha, w_fc, b_fc):
    x_flat = x.reshape(x.shape[0], -1)
    outraw = jnp.dot(x_flat.astype(jnp.bfloat16), w_emb.astype(jnp.bfloat16),
                     preferred_element_type=jnp.float32) + b_emb
    act = jnp.where(outraw >= 0, outraw, alpha[0] * outraw)
    logits = jnp.dot(act.astype(jnp.bfloat16), w_fc.astype(jnp.bfloat16),
                     preferred_element_type=jnp.float32) + b_fc
    return outraw, jax.nn.log_softmax(logits, axis=-1)


if __name__ == "__main__":
    key = jax.random.PRNGKey(0)
    k_net, k_x1, k_x2 = jax.random.split(key, 3)

    B, C_in, H, W = 2, 4, 16, 16          # NCHW input, as in PyTorch
    n_classes, embd_size = 8, 32
    in_features = C_in * H * W

    net = TripletClassNetPallas(in_features, n_classes, embd_size, k_net)

    x1 = jax.random.normal(k_x1, (B, C_in, H, W), jnp.float32)
    x2 = jax.random.normal(k_x2, (B, C_in, H, W), jnp.float32)

    # Fused two-branch path (single pallas_call for both inputs).
    outraw1, outraw2, scores1, scores2 = net.forward(x1, x2, None, None)
    jax.block_until_ready((outraw1, outraw2, scores1, scores2))

    # Reference check.
    r_out1, r_sc1 = _ref_forward(x1, net.w_emb, net.b_emb, net.alpha,
                                 net.w_fc, net.b_fc)
    r_out2, r_sc2 = _ref_forward(x2, net.w_emb, net.b_emb, net.alpha,
                                 net.w_fc, net.b_fc)
    assert jnp.allclose(outraw1, r_out1, atol=1e-3, rtol=1e-3)
    assert jnp.allclose(scores1, r_sc1, atol=1e-3, rtol=1e-3)
    assert jnp.allclose(outraw2, r_out2, atol=1e-3, rtol=1e-3)
    assert jnp.allclose(scores2, r_sc2, atol=1e-3, rtol=1e-3)

    # Fused head-only path (x=None, embeddings given directly).
    o1b, o2b, s1b, s2b = net.forward(None, None, outraw1, outraw2)
    jax.block_until_ready((s1b, s2b))
    assert jnp.allclose(s1b, scores1, atol=1e-5)
    assert jnp.allclose(s2b, scores2, atol=1e-5)

    # Mixed path (one raw input, one precomputed embedding).
    o1c, o2c, s1c, s2c = net.forward(x1, None, None, outraw2)
    jax.block_until_ready((s1c, s2c))
    assert jnp.allclose(o1c, outraw1, atol=1e-5)
    assert jnp.allclose(s1c, scores1, atol=1e-5)
    assert jnp.allclose(s2c, scores2, atol=1e-5)

    print("KERNEL_OK")
</pallas_src>

<mosaic_0001>
module attributes {stable_mosaic.version = 11 : i64} {
  func.func @_full_kernel(%arg0: memref<1xf32, #tpu.memory_space<smem>>, %arg1: memref<8x1024xbf16, #tpu.memory_space<vmem>>, %arg2: memref<1024x128xbf16, #tpu.memory_space<vmem>>, %arg3: memref<1x128xf32, #tpu.memory_space<vmem>>, %arg4: memref<128x128xbf16, #tpu.memory_space<vmem>>, %arg5: memref<1x128xf32, #tpu.memory_space<vmem>>, %arg6: memref<8x128xf32, #tpu.memory_space<vmem>>, %arg7: memref<8x128xf32, #tpu.memory_space<vmem>>) attributes {dimension_semantics = [], scalar_prefetch = 0 : i64, scratch_operands = 0 : i64, tpu.core_type = #tpu.core_type<tc>} {
    %c0 = arith.constant 0 : index
    %0 = memref.load %arg0[%c0] : memref<1xf32, #tpu.memory_space<smem>>
    %c0_0 = arith.constant 0 : index
    %c0_1 = arith.constant 0 : index
    %1 = vector.load %arg1[%c0_0, %c0_1] : memref<8x1024xbf16, #tpu.memory_space<vmem>>, vector<8x1024xbf16>
    %c0_2 = arith.constant 0 : index
    %c0_3 = arith.constant 0 : index
    %2 = vector.load %arg2[%c0_2, %c0_3] : memref<1024x128xbf16, #tpu.memory_space<vmem>>, vector<1024x128xbf16>
    %cst = arith.constant dense<0.000000e+00> : vector<8x128xf32>
    %3 = tpu.matmul %1, %2, %cst {dimension_numbers = #tpu.dot_dimension_numbers<[1], [0], [0], [1], [0, 0, 1, 1], [], []>} : vector<8x1024xbf16>, vector<1024x128xbf16>, vector<8x128xf32> -> vector<8x128xf32>
    %c0_4 = arith.constant 0 : index
    %c0_5 = arith.constant 0 : index
    %4 = vector.load %arg3[%c0_4, %c0_5] : memref<1x128xf32, #tpu.memory_space<vmem>>, vector<1x128xf32>
    %5 = vector.broadcast %4 : vector<1x128xf32> to vector<8x128xf32>
    %6 = arith.addf %3, %5 : vector<8x128xf32>
    %c0_6 = arith.constant 0 : index
    %c0_7 = arith.constant 0 : index
    %7 = vector.load %arg6[%c0_6, %c0_7] : memref<8x128xf32, #tpu.memory_space<vmem>>, vector<8x128xf32>
    tpu.vector_store %arg6[%c0_6, %c0_7], %6 {strides = array<i32>} : memref<8x128xf32, #tpu.memory_space<vmem>>, vector<8x128xf32>,
    %c0_8 = arith.constant 0 : index
    %c0_9 = arith.constant 0 : index
    %8 = vector.load %arg4[%c0_8, %c0_9] : memref<128x128xbf16, #tpu.memory_space<vmem>>, vector<128x128xbf16>
    %c0_10 = arith.constant 0 : index
    %c0_11 = arith.constant 0 : index
    %9 = vector.load %arg5[%c0_10, %c0_11] : memref<1x128xf32, #tpu.memory_space<vmem>>, vector<1x128xf32>
    %cst_12 = arith.constant 0.000000e+00 : f32
    %10 = vector.broadcast %cst_12 : f32 to vector<8x128xf32>
    %11 = arith.cmpf oge, %6, %10 : vector<8x128xf32>
    %12 = vector.broadcast %0 : f32 to vector<8x128xf32>
    %13 = arith.mulf %12, %6 : vector<8x128xf32>
    %14 = arith.select %11, %6, %13 : vector<8x128xi1>, vector<8x128xf32>
    %15 = arith.truncf %14 : vector<8x128xf32> to vector<8x128xbf16>
    %cst_13 = arith.constant dense<0.000000e+00> : vector<8x128xf32>
    %16 = tpu.matmul %15, %8, %cst_13 {dimension_numbers = #tpu.dot_dimension_numbers<[1], [0], [0], [1], [0, 0, 1, 1], [], []>} : vector<8x128xbf16>, vector<128x128xbf16>, vector<8x128xf32> -> vector<8x128xf32>
    %17 = vector.broadcast %9 : vector<1x128xf32> to vector<8x128xf32>
    %18 = arith.addf %16, %17 : vector<8x128xf32>
    %cst_14 = arith.constant dense<0xFF800000> : vector<8xf32>
    %19 = vector.multi_reduction <maximumf>, %18, %cst_14 [1] : vector<8x128xf32> to vector<8xf32>
    %20 = vector.shape_cast %19 : vector<8xf32> to vector<8x1xf32>
    %21 = vector.broadcast %20 : vector<8x1xf32> to vector<8x128xf32>
    %22 = arith.subf %18, %21 : vector<8x128xf32>
    %23 = math.exp %22 : vector<8x128xf32>
    %cst_15 = arith.constant dense<0.000000e+00> : vector<8xf32>
    %24 = vector.multi_reduction <add>, %23, %cst_15 [1] : vector<8x128xf32> to vector<8xf32>
    %25 = vector.shape_cast %24 : vector<8xf32> to vector<8x1xf32>
    %26 = math.log %25 : vector<8x1xf32>
    %27 = vector.broadcast %26 : vector<8x1xf32> to vector<8x128xf32>
    %28 = arith.subf %22, %27 : vector<8x128xf32>
    %c0_16 = arith.constant 0 : index
    %c0_17 = arith.constant 0 : index
    %29 = vector.load %arg7[%c0_16, %c0_17] : memref<8x128xf32, #tpu.memory_space<vmem>>, vector<8x128xf32>
    tpu.vector_store %arg7[%c0_16, %c0_17], %28 {strides = array<i32>} : memref<8x128xf32, #tpu.memory_space<vmem>>, vector<8x128xf32>,
    return
  }
}

</mosaic_0001>

<llo_original>
// kernel: _run_full.1
$region0: #{_run_full.1}
  #allocation0 [shape = 'u32[]', space=smem, size = 0x4, offset = 0x4, fixed_abs, tag = 'smem constant byte address 0x4 - core index']
  #allocation1 [shape = 'u32[144,128]{1,0:T(1,128)}', space=vmem, size = 0x12000, scoped, tag = 'internal scratch']
  #allocation2 [shape = 'f32[1]{0:T(128)S(6)}', space=smem, size = 0x200, scoped, tag = 'scoped memory for _run_full.1']
  %s0 = inlined_call_operand.<no memory space> [shape: f32[1], index: 0, kind: input, shape index: {}]
  %s1 = inlined_call_operand.hbm [shape: bf16[8,1024], index: 1, kind: input, shape index: {}]
  %s2 = inlined_call_operand.hbm [shape: bf16[1024,128], index: 2, kind: input, shape index: {}]
  %s3 = inlined_call_operand.vmem [shape: f32[1,128], index: 3, kind: input, shape index: {}]
  %s4 = inlined_call_operand.hbm [shape: bf16[128,128], index: 4, kind: input, shape index: {}]
  %s5 = inlined_call_operand.vmem [shape: f32[1,128], index: 5, kind: input, shape index: {}]
  %s6 = inlined_call_operand.hbm [shape: f32[8,128], index: 6, kind: output, shape index: {0}]
  %s7 = inlined_call_operand.hbm [shape: f32[8,128], index: 7, kind: output, shape index: {1}]
  %8 = xla_tuple %s6, %s7
  %s9 = sld [smem:[#allocation0]]
  $region54: #{_run_full.1} parent=0
    _
  %s11 = ssub.s32 1, %s9
  %s12 = scalar_select 0, %s11, %s9
  %13 = sst [smem:[#allocation2]] %s0
  $region1: #{_run_full.1} parent=0
    #allocation3 [shape = 'u8[16384]{0}', space=vmem, size = 0x4000, scoped, tag = 'input window, operand 1, single buffered']
    #allocation4 [shape = 's32[1]{0}', space=sflag, size = 0x4, scoped, tag = 'scoped memory for _run_full.1']
    #allocation5 [shape = 's32[1]{0}', space=sflag, size = 0x4, scoped, tag = 'scoped memory for _run_full.1']
    #allocation6 [shape = 'u8[262144]{0}', space=vmem, size = 0x40000, scoped, tag = 'input window, operand 2, single buffered']
    #allocation7 [shape = 's32[1]{0}', space=sflag, size = 0x4, scoped, tag = 'scoped memory for _run_full.1']
    #allocation8 [shape = 'u8[32768]{0}', space=vmem, size = 0x8000, scoped, tag = 'input window, operand 4, single buffered']
    #allocation9 [shape = 'u8[4096]{0}', space=vmem, size = 0x1000, scoped, tag = 'output window, operand 0, single buffered']
    #allocation10 [shape = 'u8[4096]{0}', space=vmem, size = 0x1000, scoped, tag = 'output window, operand 1, single buffered']
    #allocation11 [shape = 's32[1]{0}', space=sflag, size = 0x4, scoped, tag = 'scoped memory for _run_full.1']
    %14 = vsyncpa [#allocation4], 0
    %15 = vsyncpa [#allocation7], 0
    %16 = vsyncpa [#allocation5], 0
    %17 = vsyncpa [#allocation11], 0
    // Predicated region
    $region2: #{_run_full.1} parent=1 // pred_check
      _
    $region3: #{_run_full.1} parent=1 // pred_check_branch
      %19 = sbr.rel (0) target = $region5
    $region4: #{_run_full.1} parent=1 // pred_region
      _
    $region5: #{_run_full.1} parent=1 // pred_fallthru
      _
    // Predicated region
    $region6: #{_run_full.1} parent=1 // pred_check
      _
    $region7: #{_run_full.1} parent=1 // pred_check_branch
      %21 = sbr.rel (0) target = $region9
    $region8: #{_run_full.1} parent=1 // pred_region
      %s23 = ssub.s32 512, 512
      %24 = vsyncadd [#allocation4], %s23
      %s26 = sshll.u32 [#allocation3], 4
      %s27 = int_to_ptr.vmem [resolvable:$true] %s26
      %29 = dma.hbm_to_vmem [thread:$0]  %s1, 512, %s27, [#allocation4]
    $region9: #{_run_full.1} parent=1 // pred_fallthru
      _
    // Predicated region
    $region10: #{_run_full.1} parent=1 // pred_check
      _
    $region11: #{_run_full.1} parent=1 // pred_check_branch
      %31 = sbr.rel (0) target = $region13
    $region12: #{_run_full.1} parent=1 // pred_region
      %s33 = ssub.s32 8192, 8192
      %34 = vsyncadd [#allocation7], %s33
      %s35 = sshll.u32 [#allocation6], 4
      %s36 = int_to_ptr.vmem [resolvable:$true] %s35
      %41 = dma.hbm_to_vmem [thread:$0]  %s2, 8192, %s36, [#allocation7], 64, 64, 4
    $region13: #{_run_full.1} parent=1 // pred_fallthru
      _
    // Predicated region
    $region14: #{_run_full.1} parent=1 // pred_check
      _
    $region15: #{_run_full.1} parent=1 // pred_check_branch
      %43 = sbr.rel (0) target = $region17
    $region16: #{_run_full.1} parent=1 // pred_region
      _
    $region17: #{_run_full.1} parent=1 // pred_fallthru
      _
    // Predicated region
    $region18: #{_run_full.1} parent=1 // pred_check
      _
    $region19: #{_run_full.1} parent=1 // pred_check_branch
      %45 = sbr.rel (0) target = $region21
    $region20: #{_run_full.1} parent=1 // pred_region
      %s47 = ssub.s32 1024, 1024
      %48 = vsyncadd [#allocation7], %s47
      %s49 = sshll.u32 [#allocation8], 4
      %s50 = int_to_ptr.vmem [resolvable:$true] %s49
      %55 = dma.hbm_to_vmem [thread:$0]  %s4, 1024, %s50, [#allocation7], 64, 64, 4
    $region21: #{_run_full.1} parent=1 // pred_fallthru
      _
    // Predicated region
    $region22: #{_run_full.1} parent=1 // pred_check
      _
    $region23: #{_run_full.1} parent=1 // pred_check_branch
      %57 = sbr.rel (0) target = $region25
    $region24: #{_run_full.1} parent=1 // pred_region
      _
    $region25: #{_run_full.1} parent=1 // pred_fallthru
      _
    // Predicated region
    $region26: #{_run_full.1} parent=1 // pred_check
      _
    $region27: #{_run_full.1} parent=1 // pred_check_branch
      %59 = sbr.rel (0) target = $region29
    $region28: #{_run_full.1} parent=1 // pred_region
      %60 = dma.done [#allocation4], 512
    $region29: #{_run_full.1} parent=1 // pred_fallthru
      _
    // Predicated region
    $region30: #{_run_full.1} parent=1 // pred_check
      _
    $region31: #{_run_full.1} parent=1 // pred_check_branch
      %62 = sbr.rel (0) target = $region33
    $region32: #{_run_full.1} parent=1 // pred_region
      %63 = dma.done [#allocation7], 8192
    $region33: #{_run_full.1} parent=1 // pred_fallthru
      _
    // Predicated region
    $region34: #{_run_full.1} parent=1 // pred_check
      _
    $region35: #{_run_full.1} parent=1 // pred_check_branch
      %65 = sbr.rel (0) target = $region37
    $region36: #{_run_full.1} parent=1 // pred_region
      %66 = dma.done [#allocation7], 1024
    $region37: #{_run_full.1} parent=1 // pred_fallthru
      _
    %s68 = sld [smem:[#allocation2]]
    %v69 = vld [vmem:[#allocation3] sm:$0xff]
    %v70 = vld [vmem:[#allocation3 + $0x8] sm:$0xff]
    %v71 = vld [vmem:[#allocation3 + $0x10] sm:$0xff]
    %v72 = vld [vmem:[#allocation3 + $0x18] sm:$0xff]
    %v73 = vld [vmem:[#allocation6] sm:$0xf]
    %v74 = vld [vmem:[#allocation6 + $0x4] sm:$0xf]
    %v75 = vld [vmem:[#allocation6 + $0x8] sm:$0xf]
    %v76 = vld [vmem:[#allocation6 + $0xc] sm:$0xf]
    %v77 = vld [vmem:[#allocation6 + $0x10] sm:$0xf]
    %v78 = vld [vmem:[#allocation6 + $0x14] sm:$0xf]
    %v79 = vld [vmem:[#allocation6 + $0x18] sm:$0xf]
    %v80 = vld [vmem:[#allocation6 + $0x1c] sm:$0xf]
    %v81 = vld [vmem:[#allocation6 + $0x20] sm:$0xf]
    %v82 = vld [vmem:[#allocation6 + $0x24] sm:$0xf]
    %v83 = vld [vmem:[#allocation6 + $0x28] sm:$0xf]
    %v84 = vld [vmem:[#allocation6 + $0x2c] sm:$0xf]
    %v85 = vld [vmem:[#allocation6 + $0x30] sm:$0xf]
    %v86 = vld [vmem:[#allocation6 + $0x34] sm:$0xf]
    %v87 = vld [vmem:[#allocation6 + $0x38] sm:$0xf]
    %v88 = vld [vmem:[#allocation6 + $0x3c] sm:$0xf]
    %v89 = vld [vmem:[#allocation6 + $0x40] sm:$0xf]
    %v90 = vld [vmem:[#allocation6 + $0x44] sm:$0xf]
    %v91 = vld [vmem:[#allocation6 + $0x48] sm:$0xf]
    %v92 = vld [vmem:[#allocation6 + $0x4c] sm:$0xf]
    %v93 = vld [vmem:[#allocation6 + $0x50] sm:$0xf]
    %v94 = vld [vmem:[#allocation6 + $0x54] sm:$0xf]
    %v95 = vld [vmem:[#allocation6 + $0x58] sm:$0xf]
    %v96 = vld [vmem:[#allocation6 + $0x5c] sm:$0xf]
    %v97 = vld [vmem:[#allocation6 + $0x60] sm:$0xf]
    %v98 = vld [vmem:[#allocation6 + $0x64] sm:$0xf]
    %v99 = vld [vmem:[#allocation6 + $0x68] sm:$0xf]
    %v100 = vld [vmem:[#allocation6 + $0x6c] sm:$0xf]
    %v101 = vld [vmem:[#allocation6 + $0x70] sm:$0xf]
    %v102 = vld [vmem:[#allocation6 + $0x74] sm:$0xf]
    %v103 = vld [vmem:[#allocation6 + $0x78] sm:$0xf]
    %v104 = vld [vmem:[#allocation6 + $0x7c] sm:$0xf]
    %v105 = vld [vmem:[#allocation6 + $0x80] sm:$0xf]
    %v106 = vld [vmem:[#allocation6 + $0x84] sm:$0xf]
    %v107 = vld [vmem:[#allocation6 + $0x88] sm:$0xf]
    %v108 = vld [vmem:[#allocation6 + $0x8c] sm:$0xf]
    %v109 = vld [vmem:[#allocation6 + $0x90] sm:$0xf]
    %v110 = vld [vmem:[#allocation6 + $0x94] sm:$0xf]
    %v111 = vld [vmem:[#allocation6 + $0x98] sm:$0xf]
    %v112 = vld [vmem:[#allocation6 + $0x9c] sm:$0xf]
    %v113 = vld [vmem:[#allocation6 + $0xa0] sm:$0xf]
    %v114 = vld [vmem:[#allocation6 + $0xa4] sm:$0xf]
    %v115 = vld [vmem:[#allocation6 + $0xa8] sm:$0xf]
    %v116 = vld [vmem:[#allocation6 + $0xac] sm:$0xf]
    %v117 = vld [vmem:[#allocation6 + $0xb0] sm:$0xf]
    %v118 = vld [vmem:[#allocation6 + $0xb4] sm:$0xf]
    %v119 = vld [vmem:[#allocation6 + $0xb8] sm:$0xf]
    %v120 = vld [vmem:[#allocation6 + $0xbc] sm:$0xf]
    %v121 = vld [vmem:[#allocation6 + $0xc0] sm:$0xf]
    %v122 = vld [vmem:[#allocation6 + $0xc4] sm:$0xf]
    %v123 = vld [vmem:[#allocation6 + $0xc8] sm:$0xf]
    %v124 = vld [vmem:[#allocation6 + $0xcc] sm:$0xf]
    %v125 = vld [vmem:[#allocation6 + $0xd0] sm:$0xf]
    %v126 = vld [vmem:[#allocation6 + $0xd4] sm:$0xf]
    %v127 = vld [vmem:[#allocation6 + $0xd8] sm:$0xf]
    %v128 = vld [vmem:[#allocation6 + $0xdc] sm:$0xf]
    %v129 = vld [vmem:[#allocation6 + $0xe0] sm:$0xf]
    %v130 = vld [vmem:[#allocation6 + $0xe4] sm:$0xf]
    %v131 = vld [vmem:[#allocation6 + $0xe8] sm:$0xf]
    %v132 = vld [vmem:[#allocation6 + $0xec] sm:$0xf]
    %v133 = vld [vmem:[#allocation6 + $0xf0] sm:$0xf]
    %v134 = vld [vmem:[#allocation6 + $0xf4] sm:$0xf]
    %v135 = vld [vmem:[#allocation6 + $0xf8] sm:$0xf]
    %v136 = vld [vmem:[#allocation6 + $0xfc] sm:$0xf]
    %v137 = vld [vmem:[#allocation6 + $0x100] sm:$0xf]
    %v138 = vld [vmem:[#allocation6 + $0x104] sm:$0xf]
    %v139 = vld [vmem:[#allocation6 + $0x108] sm:$0xf]
    %v140 = vld [vmem:[#allocation6 + $0x10c] sm:$0xf]
    %v141 = vld [vmem:[#allocation6 + $0x110] sm:$0xf]
    %v142 = vld [vmem:[#allocation6 + $0x114] sm:$0xf]
    %v143 = vld [vmem:[#allocation6 + $0x118] sm:$0xf]
    %v144 = vld [vmem:[#allocation6 + $0x11c] sm:$0xf]
    %v145 = vld [vmem:[#allocation6 + $0x120] sm:$0xf]
    %v146 = vld [vmem:[#allocation6 + $0x124] sm:$0xf]
    %v147 = vld [vmem:[#allocation6 + $0x128] sm:$0xf]
    %v148 = vld [vmem:[#allocation6 + $0x12c] sm:$0xf]
    %v149 = vld [vmem:[#allocation6 + $0x130] sm:$0xf]
    %v150 = vld [vmem:[#allocation6 + $0x134] sm:$0xf]
    %v151 = vld [vmem:[#allocation6 + $0x138] sm:$0xf]
    %v152 = vld [vmem:[#allocation6 + $0x13c] sm:$0xf]
    %v153 = vld [vmem:[#allocation6 + $0x140] sm:$0xf]
    %v154 = vld [vmem:[#allocation6 + $0x144] sm:$0xf]
    %v155 = vld [vmem:[#allocation6 + $0x148] sm:$0xf]
    %v156 = vld [vmem:[#allocation6 + $0x14c] sm:$0xf]
    %v157 = vld [vmem:[#allocation6 + $0x150] sm:$0xf]
    %v158 = vld [vmem:[#allocation6 + $0x154] sm:$0xf]
    %v159 = vld [vmem:[#allocation6 + $0x158] sm:$0xf]
    %v160 = vld [vmem:[#allocation6 + $0x15c] sm:$0xf]
    %v161 = vld [vmem:[#allocation6 + $0x160] sm:$0xf]
    %v162 = vld [vmem:[#allocation6 + $0x164] sm:$0xf]
    %v163 = vld [vmem:[#allocation6 + $0x168] sm:$0xf]
    %v164 = vld [vmem:[#allocation6 + $0x16c] sm:$0xf]
    %v165 = vld [vmem:[#allocation6 + $0x170] sm:$0xf]
    %v166 = vld [vmem:[#allocation6 + $0x174] sm:$0xf]
    %v167 = vld [vmem:[#allocation6 + $0x178] sm:$0xf]
    %v168 = vld [vmem:[#allocation6 + $0x17c] sm:$0xf]
    %v169 = vld [vmem:[#allocation6 + $0x180] sm:$0xf]
    %v170 = vld [vmem:[#allocation6 + $0x184] sm:$0xf]
    %v171 = vld [vmem:[#allocation6 + $0x188] sm:$0xf]
    %v172 = vld [vmem:[#allocation6 + $0x18c] sm:$0xf]
    %v173 = vld [vmem:[#allocation6 + $0x190] sm:$0xf]
    %v174 = vld [vmem:[#allocation6 + $0x194] sm:$0xf]
    %v175 = vld [vmem:[#allocation6 + $0x198] sm:$0xf]
    %v176 = vld [vmem:[#allocation6 + $0x19c] sm:$0xf]
    %v177 = vld [vmem:[#allocation6 + $0x1a0] sm:$0xf]
    %v178 = vld [vmem:[#allocation6 + $0x1a4] sm:$0xf]
    %v179 = vld [vmem:[#allocation6 + $0x1a8] sm:$0xf]
    %v180 = vld [vmem:[#allocation6 + $0x1ac] sm:$0xf]
    %v181 = vld [vmem:[#allocation6 + $0x1b0] sm:$0xf]
    %v182 = vld [vmem:[#allocation6 + $0x1b4] sm:$0xf]
    %v183 = vld [vmem:[#allocation6 + $0x1b8] sm:$0xf]
    %v184 = vld [vmem:[#allocation6 + $0x1bc] sm:$0xf]
    %v185 = vld [vmem:[#allocation6 + $0x1c0] sm:$0xf]
    %v186 = vld [vmem:[#allocation6 + $0x1c4] sm:$0xf]
    %v187 = vld [vmem:[#allocation6 + $0x1c8] sm:$0xf]
    %v188 = vld [vmem:[#allocation6 + $0x1cc] sm:$0xf]
    %v189 = vld [vmem:[#allocation6 + $0x1d0] sm:$0xf]
    %v190 = vld [vmem:[#allocation6 + $0x1d4] sm:$0xf]
    %v191 = vld [vmem:[#allocation6 + $0x1d8] sm:$0xf]
    %v192 = vld [vmem:[#allocation6 + $0x1dc] sm:$0xf]
    %v193 = vld [vmem:[#allocation6 + $0x1e0] sm:$0xf]
    %v194 = vld [vmem:[#allocation6 + $0x1e4] sm:$0xf]
    %v195 = vld [vmem:[#allocation6 + $0x1e8] sm:$0xf]
    %v196 = vld [vmem:[#allocation6 + $0x1ec] sm:$0xf]
    %v197 = vld [vmem:[#allocation6 + $0x1f0] sm:$0xf]
    %v198 = vld [vmem:[#allocation6 + $0x1f4] sm:$0xf]
    %v199 = vld [vmem:[#allocation6 + $0x1f8] sm:$0xf]
    %v200 = vld [vmem:[#allocation6 + $0x1fc] sm:$0xf]
    %v201 = vld [vmem:[%s3] sm:$0x1]
    %v203 = vlaneseq
    %v204 = vshrl.u32 %v203, 7
    %v205 = vsub.s32 0, %v204
    %v206 = vrot.slane %v201, %v205
    %v212 = vunpack.c.l.b16 %v69
    %v213 = vunpack.c.h.b16 %v69
    %v214 = vunpack.c.l.b16 %v70
    %v215 = vunpack.c.h.b16 %v70
    %v216 = vunpack.c.l.b16 %v71
    %v217 = vunpack.c.h.b16 %v71
    %v218 = vunpack.c.l.b16 %v72
    %v219 = vunpack.c.h.b16 %v72
    %v220 = vpack.c.b16 %v212, %v212
    %v221 = vpack.c.b16 %v213, %v213
    %v222 = vpack.c.b16 %v214, %v214
    %v223 = vpack.c.b16 %v215, %v215
    %v224 = vpack.c.b16 %v216, %v216
    %v225 = vpack.c.b16 %v217, %v217
    %v226 = vpack.c.b16 %v218, %v218
    %v227 = vpack.c.b16 %v219, %v219
    %v364 = vunpack.c.l.b16 %v73
    %v365 = vunpack.c.l.b16 %v74
    %v366 = vunpack.c.l.b16 %v75
    %v367 = vunpack.c.l.b16 %v76
    %v368 = vunpack.c.l.b16 %v77
    %v369 = vunpack.c.l.b16 %v78
    %v370 = vunpack.c.l.b16 %v79
    %v371 = vunpack.c.l.b16 %v80
    %v372 = vunpack.c.l.b16 %v81
    %v373 = vunpack.c.l.b16 %v82
    %v374 = vunpack.c.l.b16 %v83
    %v375 = vunpack.c.l.b16 %v84
    %v376 = vunpack.c.l.b16 %v85
    %v377 = vunpack.c.l.b16 %v86
    %v378 = vunpack.c.l.b16 %v87
    %v379 = vunpack.c.l.b16 %v88
    %v380 = vunpack.c.l.b16 %v89
    %v381 = vunpack.c.l.b16 %v90
    %v382 = vunpack.c.l.b16 %v91
    %v383 = vunpack.c.l.b16 %v92
    %v384 = vunpack.c.l.b16 %v93
    %v385 = vunpack.c.l.b16 %v94
    %v386 = vunpack.c.l.b16 %v95
    %v387 = vunpack.c.l.b16 %v96
    %v388 = vunpack.c.l.b16 %v97
    %v389 = vunpack.c.l.b16 %v98
    %v390 = vunpack.c.l.b16 %v99
    %v391 = vunpack.c.l.b16 %v100
    %v392 = vunpack.c.l.b16 %v101
    %v393 = vunpack.c.l.b16 %v102
    %v394 = vunpack.c.l.b16 %v103
    %v395 = vunpack.c.l.b16 %v104
    %v396 = vunpack.c.l.b16 %v105
    %v397 = vunpack.c.l.b16 %v106
    %v398 = vunpack.c.l.b16 %v107
    %v399 = vunpack.c.l.b16 %v108
    %v400 = vunpack.c.l.b16 %v109
    %v401 = vunpack.c.l.b16 %v110
    %v402 = vunpack.c.l.b16 %v111
    %v403 = vunpack.c.l.b16 %v112
    %v404 = vunpack.c.l.b16 %v113
    %v405 = vunpack.c.l.b16 %v114
    %v406 = vunpack.c.l.b16 %v115
    %v407 = vunpack.c.l.b16 %v116
    %v408 = vunpack.c.l.b16 %v117
    %v409 = vunpack.c.l.b16 %v118
    %v410 = vunpack.c.l.b16 %v119
    %v411 = vunpack.c.l.b16 %v120
    %v412 = vunpack.c.l.b16 %v121
    %v413 = vunpack.c.l.b16 %v122
    %v414 = vunpack.c.l.b16 %v123
    %v415 = vunpack.c.l.b16 %v124
    %v416 = vunpack.c.l.b16 %v125
    %v417 = vunpack.c.l.b16 %v126
    %v418 = vunpack.c.l.b16 %v127
    %v419 = vunpack.c.l.b16 %v128
    %v420 = vunpack.c.l.b16 %v129
    %v421 = vunpack.c.l.b16 %v130
    %v422 = vunpack.c.l.b16 %v131
    %v423 = vunpack.c.l.b16 %v132
    %v424 = vunpack.c.l.b16 %v133
    %v425 = vunpack.c.l.b16 %v134
    %v426 = vunpack.c.l.b16 %v135
    %v427 = vunpack.c.l.b16 %v136
    %v428 = vunpack.c.l.b16 %v137
    %v429 = vunpack.c.l.b16 %v138
    %v430 = vunpack.c.l.b16 %v139
    %v431 = vunpack.c.l.b16 %v140
    %v432 = vunpack.c.l.b16 %v141
    %v433 = vunpack.c.l.b16 %v142
    %v434 = vunpack.c.l.b16 %v143
    %v435 = vunpack.c.l.b16 %v144
    %v436 = vunpack.c.l.b16 %v145
    %v437 = vunpack.c.l.b16 %v146
    %v438 = vunpack.c.l.b16 %v147
    %v439 = vunpack.c.l.b16 %v148
    %v440 = vunpack.c.l.b16 %v149
    %v441 = vunpack.c.l.b16 %v150
    %v442 = vunpack.c.l.b16 %v151
    %v443 = vunpack.c.l.b16 %v152
    %v444 = vunpack.c.l.b16 %v153
    %v445 = vunpack.c.l.b16 %v154
    %v446 = vunpack.c.l.b16 %v155
    %v447 = vunpack.c.l.b16 %v156
    %v448 = vunpack.c.l.b16 %v157
    %v449 = vunpack.c.l.b16 %v158
    %v450 = vunpack.c.l.b16 %v159
    %v451 = vunpack.c.l.b16 %v160
    %v452 = vunpack.c.l.b16 %v161
    %v453 = vunpack.c.l.b16 %v162
    %v454 = vunpack.c.l.b16 %v163
    %v455 = vunpack.c.l.b16 %v164
    %v456 = vunpack.c.l.b16 %v165
    %v457 = vunpack.c.l.b16 %v166
    %v458 = vunpack.c.l.b16 %v167
    %v459 = vunpack.c.l.b16 %v168
    %v460 = vunpack.c.l.b16 %v169
    %v461 = vunpack.c.l.b16 %v170
    %v462 = vunpack.c.l.b16 %v171
    %v463 = vunpack.c.l.b16 %v172
    %v464 = vunpack.c.l.b16 %v173
    %v465 = vunpack.c.l.b16 %v174
    %v466 = vunpack.c.l.b16 %v175
    %v467 = vunpack.c.l.b16 %v176
    %v468 = vunpack.c.l.b16 %v177
    %v469 = vunpack.c.l.b16 %v178
    %v470 = vunpack.c.l.b16 %v179
    %v471 = vunpack.c.l.b16 %v180
    %v472 = vunpack.c.l.b16 %v181
    %v473 = vunpack.c.l.b16 %v182
    %v474 = vunpack.c.l.b16 %v183
    %v475 = vunpack.c.l.b16 %v184
    %v476 = vunpack.c.l.b16 %v185
    %v477 = vunpack.c.l.b16 %v186
    %v478 = vunpack.c.l.b16 %v187
    %v479 = vunpack.c.l.b16 %v188
    %v480 = vunpack.c.l.b16 %v189
    %v481 = vunpack.c.l.b16 %v190
    %v482 = vunpack.c.l.b16 %v191
    %v483 = vunpack.c.l.b16 %v192
    %v484 = vunpack.c.l.b16 %v193
    %v485 = vunpack.c.l.b16 %v194
    %v486 = vunpack.c.l.b16 %v195
    %v487 = vunpack.c.l.b16 %v196
    %v488 = vunpack.c.l.b16 %v197
    %v489 = vunpack.c.l.b16 %v198
    %v490 = vunpack.c.l.b16 %v199
    %v491 = vunpack.c.l.b16 %v200
    %v492 = vpack.c.b16 %v365, %v364
    %v493 = vpack.c.b16 %v367, %v366
    %v494 = vpack.c.b16 %v369, %v368
    %v495 = vpack.c.b16 %v371, %v370
    %v496 = vpack.c.b16 %v373, %v372
    %v497 = vpack.c.b16 %v375, %v374
    %v498 = vpack.c.b16 %v377, %v376
    %v499 = vpack.c.b16 %v379, %v378
    %v500 = vpack.c.b16 %v381, %v380
    %v501 = vpack.c.b16 %v383, %v382
    %v502 = vpack.c.b16 %v385, %v384
    %v503 = vpack.c.b16 %v387, %v386
    %v504 = vpack.c.b16 %v389, %v388
    %v505 = vpack.c.b16 %v391, %v390
    %v506 = vpack.c.b16 %v393, %v392
    %v507 = vpack.c.b16 %v395, %v394
    %v508 = vpack.c.b16 %v397, %v396
    %v509 = vpack.c.b16 %v399, %v398
    %v510 = vpack.c.b16 %v401, %v400
    %v511 = vpack.c.b16 %v403, %v402
    %v512 = vpack.c.b16 %v405, %v404
    %v513 = vpack.c.b16 %v407, %v406
    %v514 = vpack.c.b16 %v409, %v408
    %v515 = vpack.c.b16 %v411, %v410
    %v516 = vpack.c.b16 %v413, %v412
    %v517 = vpack.c.b16 %v415, %v414
    %v518 = vpack.c.b16 %v417, %v416
    %v519 = vpack.c.b16 %v419, %v418
    %v520 = vpack.c.b16 %v421, %v420
    %v521 = vpack.c.b16 %v423, %v422
    %v522 = vpack.c.b16 %v425, %v424
    %v523 = vpack.c.b16 %v427, %v426
    %v524 = vpack.c.b16 %v429, %v428
    %v525 = vpack.c.b16 %v431, %v430
    %v526 = vpack.c.b16 %v433, %v432
    %v527 = vpack.c.b16 %v435, %v434
    %v528 = vpack.c.b16 %v437, %v436
    %v529 = vpack.c.b16 %v439, %v438
    %v530 = vpack.c.b16 %v441, %v440
    %v531 = vpack.c.b16 %v443, %v442
    %v532 = vpack.c.b16 %v445, %v444
    %v533 = vpack.c.b16 %v447, %v446
    %v534 = vpack.c.b16 %v449, %v448
    %v535 = vpack.c.b16 %v451, %v450
    %v536 = vpack.c.b16 %v453, %v452
    %v537 = vpack.c.b16 %v455, %v454
    %v538 = vpack.c.b16 %v457, %v456
    %v539 = vpack.c.b16 %v459, %v458
    %v540 = vpack.c.b16 %v461, %v460
    %v541 = vpack.c.b16 %v463, %v462
    %v542 = vpack.c.b16 %v465, %v464
    %v543 = vpack.c.b16 %v467, %v466
    %v544 = vpack.c.b16 %v469, %v468
    %v545 = vpack.c.b16 %v471, %v470
    %v546 = vpack.c.b16 %v473, %v472
    %v547 = vpack.c.b16 %v475, %v474
    %v548 = vpack.c.b16 %v477, %v476
    %v549 = vpack.c.b16 %v479, %v478
    %v550 = vpack.c.b16 %v481, %v480
    %v551 = vpack.c.b16 %v483, %v482
    %v552 = vpack.c.b16 %v485, %v484
    %v553 = vpack.c.b16 %v487, %v486
    %v554 = vpack.c.b16 %v489, %v488
    %v555 = vpack.c.b16 %v491, %v490
    %620 = vmatprep.subr.bf16.mxu0 0
    %621 = vmatpush1.bf16.msra.mxu0 %v492
    %622 = vmatprep.subr.bf16.mxu0 0
    %623 = vmatpush1.bf16.msra.mxu0 %v493
    %624 = vmatprep.subr.bf16.mxu0 0
    %625 = vmatpush1.bf16.msra.mxu0 %v494
    %626 = vmatprep.subr.bf16.mxu0 0
    %627 = vmatpush1.bf16.msra.mxu0 %v495
    %628 = vmatprep.subr.bf16.mxu0 0
    %629 = vmatpush1.bf16.msra.mxu0 %v496
    %630 = vmatprep.subr.bf16.mxu0 0
    %631 = vmatpush1.bf16.msra.mxu0 %v497
    %632 = vmatprep.subr.bf16.mxu0 0
    %633 = vmatpush1.bf16.msra.mxu0 %v498
    %634 = vmatprep.subr.bf16.mxu0 0
    %635 = vmatpush1.bf16.msra.mxu0 %v499
    %636 = vmatprep.subr.bf16.mxu0 0
    %637 = vmatpush1.bf16.msra.mxu0 %v500
    %638 = vmatprep.subr.bf16.mxu0 0
    %639 = vmatpush1.bf16.msra.mxu0 %v501
    %640 = vmatprep.subr.bf16.mxu0 0
    %641 = vmatpush1.bf16.msra.mxu0 %v502
    %642 = vmatprep.subr.bf16.mxu0 0
    %643 = vmatpush1.bf16.msra.mxu0 %v503
    %644 = vmatprep.subr.bf16.mxu0 0
    %645 = vmatpush1.bf16.msra.mxu0 %v504
    %646 = vmatprep.subr.bf16.mxu0 0
    %647 = vmatpush1.bf16.msra.mxu0 %v505
    %648 = vmatprep.subr.bf16.mxu0 0
    %649 = vmatpush1.bf16.msra.mxu0 %v506
    %650 = vmatprep.subr.bf16.mxu0 0
    %651 = vmatpush1.bf16.msra.mxu0 %v507
    %652 = vmatprep.mubr.bf16.mxu0 %v221
    %653 = vmatmul.mubr.bf16.gmra.mrb[0].mxu0 %v220
    %v654 = vpop.f32.mrb[0].mxu0
    %v655 = vadd.f32 %v206, %v654
    %v656 = vpop.f32.mrb[0].mxu0
    %v657 = vpop.f32.mrb[0].mxu0
    %v658 = vpop.f32.mrb[0].mxu0
    %659 = vdwg.mxu0
    %660 = vmatprep.subr.bf16.mxu0 0
    %661 = vmatpush1.bf16.msra.mxu0 %v508
    %662 = vmatprep.subr.bf16.mxu0 0
    %663 = vmatpush1.bf16.msra.mxu0 %v509
    %664 = vmatprep.subr.bf16.mxu0 0
    %665 = vmatpush1.bf16.msra.mxu0 %v510
    %666 = vmatprep.subr.bf16.mxu0 0
    %667 = vmatpush1.bf16.msra.mxu0 %v511
    %668 = vmatprep.subr.bf16.mxu0 0
    %669 = vmatpush1.bf16.msra.mxu0 %v512
    %670 = vmatprep.subr.bf16.mxu0 0
    %671 = vmatpush1.bf16.msra.mxu0 %v513
    %672 = vmatprep.subr.bf16.mxu0 0
    %673 = vmatpush1.bf16.msra.mxu0 %v514
    %674 = vmatprep.subr.bf16.mxu0 0
    %675 = vmatpush1.bf16.msra.mxu0 %v515
    %676 = vmatprep.subr.bf16.mxu0 0
    %677 = vmatpush1.bf16.msra.mxu0 %v516
    %678 = vmatprep.subr.bf16.mxu0 0
    %679 = vmatpush1.bf16.msra.mxu0 %v517
    %680 = vmatprep.subr.bf16.mxu0 0
    %681 = vmatpush1.bf16.msra.mxu0 %v518
    %682 = vmatprep.subr.bf16.mxu0 0
    %683 = vmatpush1.bf16.msra.mxu0 %v519
    %684 = vmatprep.subr.bf16.mxu0 0
    %685 = vmatpush1.bf16.msra.mxu0 %v520
    %686 = vmatprep.subr.bf16.mxu0 0
    %687 = vmatpush1.bf16.msra.mxu0 %v521
    %688 = vmatprep.subr.bf16.mxu0 0
    %689 = vmatpush1.bf16.msra.mxu0 %v522
    %690 = vmatprep.subr.bf16.mxu0 0
    %691 = vmatpush1.bf16.msra.mxu0 %v523
    %692 = vmatprep.mubr.bf16.mxu0 %v223
    %693 = vmatmul.mubr.bf16.gmra.mrb[0].mxu0 %v222
    %v694 = vpop.f32.mrb[0].mxu0
    %v695 = vadd.f32 %v655, %v694
    %v696 = vpop.f32.mrb[0].mxu0
    %v697 = vpop.f32.mrb[0].mxu0
    %v698 = vpop.f32.mrb[0].mxu0
    %699 = vdwg.mxu0
    %700 = vmatprep.subr.bf16.mxu0 0
    %701 = vmatpush1.bf16.msra.mxu0 %v524
    %702 = vmatprep.subr.bf16.mxu0 0
    %703 = vmatpush1.bf16.msra.mxu0 %v525
    %704 = vmatprep.subr.bf16.mxu0 0
    %705 = vmatpush1.bf16.msra.mxu0 %v526
    %706 = vmatprep.subr.bf16.mxu0 0
    %707 = vmatpush1.bf16.msra.mxu0 %v527
    %708 = vmatprep.subr.bf16.mxu0 0
    %709 = vmatpush1.bf16.msra.mxu0 %v528
    %710 = vmatprep.subr.bf16.mxu0 0
    %711 = vmatpush1.bf16.msra.mxu0 %v529
    %712 = vmatprep.subr.bf16.mxu0 0
    %713 = vmatpush1.bf16.msra.mxu0 %v530
    %714 = vmatprep.subr.bf16.mxu0 0
    %715 = vmatpush1.bf16.msra.mxu0 %v531
    %716 = vmatprep.subr.bf16.mxu0 0
    %717 = vmatpush1.bf16.msra.mxu0 %v532
    %718 = vmatprep.subr.bf16.mxu0 0
    %719 = vmatpush1.bf16.msra.mxu0 %v533
    %720 = vmatprep.subr.bf16.mxu0 0
    %721 = vmatpush1.bf16.msra.mxu0 %v534
    %722 = vmatprep.subr.bf16.mxu0 0
    %723 = vmatpush1.bf16.msra.mxu0 %v535
    %724 = vmatprep.subr.bf16.mxu0 0
    %725 = vmatpush1.bf16.msra.mxu0 %v536
    %726 = vmatprep.subr.bf16.mxu0 0
    %727 = vmatpush1.bf16.msra.mxu0 %v537
    %728 = vmatprep.subr.bf16.mxu0 0
    %729 = vmatpush1.bf16.msra.mxu0 %v538
    %730 = vmatprep.subr.bf16.mxu0 0
    %731 = vmatpush1.bf16.msra.mxu0 %v539
    %732 = vmatprep.mubr.bf16.mxu0 %v225
    %733 = vmatmul.mubr.bf16.gmra.mrb[0].mxu0 %v224
    %v734 = vpop.f32.mrb[0].mxu0
    %v735 = vadd.f32 %v695, %v734
    %v736 = vpop.f32.mrb[0].mxu0
    %v737 = vpop.f32.mrb[0].mxu0
    %v738 = vpop.f32.mrb[0].mxu0
    %739 = vdwg.mxu0
    %740 = vmatprep.subr.bf16.mxu0 0
    %741 = vmatpush1.bf16.msra.mxu0 %v540
    %742 = vmatprep.subr.bf16.mxu0 0
    %743 = vmatpush1.bf16.msra.mxu0 %v541
    %744 = vmatprep.subr.bf16.mxu0 0
    %745 = vmatpush1.bf16.msra.mxu0 %v542
    %746 = vmatprep.subr.bf16.mxu0 0
    %747 = vmatpush1.bf16.msra.mxu0 %v543
    %748 = vmatprep.subr.bf16.mxu0 0
    %749 = vmatpush1.bf16.msra.mxu0 %v544
    %750 = vmatprep.subr.bf16.mxu0 0
    %751 = vmatpush1.bf16.msra.mxu0 %v545
    %752 = vmatprep.subr.bf16.mxu0 0
    %753 = vmatpush1.bf16.msra.mxu0 %v546
    %754 = vmatprep.subr.bf16.mxu0 0
    %755 = vmatpush1.bf16.msra.mxu0 %v547
    %756 = vmatprep.subr.bf16.mxu0 0
    %757 = vmatpush1.bf16.msra.mxu0 %v548
    %758 = vmatprep.subr.bf16.mxu0 0
    %759 = vmatpush1.bf16.msra.mxu0 %v549
    %760 = vmatprep.subr.bf16.mxu0 0
    %761 = vmatpush1.bf16.msra.mxu0 %v550
    %762 = vmatprep.subr.bf16.mxu0 0
    %763 = vmatpush1.bf16.msra.mxu0 %v551
    %764 = vmatprep.subr.bf16.mxu0 0
    %765 = vmatpush1.bf16.msra.mxu0 %v552
    %766 = vmatprep.subr.bf16.mxu0 0
    %767 = vmatpush1.bf16.msra.mxu0 %v553
    %768 = vmatprep.subr.bf16.mxu0 0
    %769 = vmatpush1.bf16.msra.mxu0 %v554
    %770 = vmatprep.subr.bf16.mxu0 0
    %771 = vmatpush1.bf16.msra.mxu0 %v555
    %772 = vmatprep.mubr.bf16.mxu0 %v227
    %773 = vmatmul.mubr.bf16.gmra.mrb[0].mxu0 %v226
    %v774 = vpop.f32.mrb[0].mxu0
    %v775 = vadd.f32 %v735, %v774
    %v776 = vpop.f32.mrb[0].mxu0
    %v777 = vpop.f32.mrb[0].mxu0
    %v778 = vpop.f32.mrb[0].mxu0
    %779 = vdwg.mxu0
    %780 = vst [vmem:[#allocation9] sm:$0xff] %v775
    %v781 = vld [vmem:[#allocation8] sm:$0xf]
    %v782 = vld [vmem:[#allocation8 + $0x4] sm:$0xf]
    %v783 = vld [vmem:[#allocation8 + $0x8] sm:$0xf]
    %v784 = vld [vmem:[#allocation8 + $0xc] sm:$0xf]
    %v785 = vld [vmem:[#allocation8 + $0x10] sm:$0xf]
    %v786 = vld [vmem:[#allocation8 + $0x14] sm:$0xf]
    %v787 = vld [vmem:[#allocation8 + $0x18] sm:$0xf]
    %v788 = vld [vmem:[#allocation8 + $0x1c] sm:$0xf]
    %v789 = vld [vmem:[#allocation8 + $0x20] sm:$0xf]
    %v790 = vld [vmem:[#allocation8 + $0x24] sm:$0xf]
    %v791 = vld [vmem:[#allocation8 + $0x28] sm:$0xf]
    %v792 = vld [vmem:[#allocation8 + $0x2c] sm:$0xf]
    %v793 = vld [vmem:[#allocation8 + $0x30] sm:$0xf]
    %v794 = vld [vmem:[#allocation8 + $0x34] sm:$0xf]
    %v795 = vld [vmem:[#allocation8 + $0x38] sm:$0xf]
    %v796 = vld [vmem:[#allocation8 + $0x3c] sm:$0xf]
    %v797 = vld [vmem:[%s5] sm:$0x1]
    %vm798 = vcmp.ge.f32.partialorder %v775, 0.0
    %v799 = vstv %s68
    %v800 = vmul.f32 %v799, %v775
    %v801 = vsel %vm798, %v775, %v800
    %v802 = vpack.c.bf16 %v801, %v801
    %v804 = vlaneseq
    %v805 = vshrl.u32 %v804, 7
    %v806 = vsub.s32 0, %v805
    %v807 = vrot.slane %v797, %v806
    %v825 = vunpack.c.l.b16 %v781
    %v826 = vunpack.c.l.b16 %v782
    %v827 = vunpack.c.l.b16 %v783
    %v828 = vunpack.c.l.b16 %v784
    %v829 = vunpack.c.l.b16 %v785
    %v830 = vunpack.c.l.b16 %v786
    %v831 = vunpack.c.l.b16 %v787
    %v832 = vunpack.c.l.b16 %v788
    %v833 = vunpack.c.l.b16 %v789
    %v834 = vunpack.c.l.b16 %v790
    %v835 = vunpack.c.l.b16 %v791
    %v836 = vunpack.c.l.b16 %v792
    %v837 = vunpack.c.l.b16 %v793
    %v838 = vunpack.c.l.b16 %v794
    %v839 = vunpack.c.l.b16 %v795
    %v840 = vunpack.c.l.b16 %v796
    %v841 = vpack.c.b16 %v826, %v825
    %v842 = vpack.c.b16 %v828, %v827
    %v843 = vpack.c.b16 %v830, %v829
    %v844 = vpack.c.b16 %v832, %v831
    %v845 = vpack.c.b16 %v834, %v833
    %v846 = vpack.c.b16 %v836, %v835
    %v847 = vpack.c.b16 %v838, %v837
    %v848 = vpack.c.b16 %v840, %v839
    %857 = vmatprep.subr.bf16.mxu0 0
    %858 = vmatpush1.bf16.msra.mxu0 %v841
    %859 = vmatprep.subr.bf16.mxu0 0
    %860 = vmatpush1.bf16.msra.mxu0 %v842
    %861 = vmatprep.subr.bf16.mxu0 0
    %862 = vmatpush1.bf16.msra.mxu0 %v843
    %863 = vmatprep.subr.bf16.mxu0 0
    %864 = vmatpush1.bf16.msra.mxu0 %v844
    %865 = vmatprep.subr.bf16.mxu0 0
    %866 = vmatpush1.bf16.msra.mxu0 %v845
    %867 = vmatprep.subr.bf16.mxu0 0
    %868 = vmatpush1.bf16.msra.mxu0 %v846
    %869 = vmatprep.subr.bf16.mxu0 0
    %870 = vmatpush1.bf16.msra.mxu0 %v847
    %871 = vmatprep.subr.bf16.mxu0 0
    %872 = vmatpush1.bf16.msra.mxu0 %v848
    %873 = vmatprep.subr.bf16.mxu0 0
    %874 = vmatpush1.bf16.msra.mxu0 0
    %875 = vmatprep.subr.bf16.mxu0 0
    %876 = vmatpush1.bf16.msra.mxu0 0
    %877 = vmatprep.subr.bf16.mxu0 0
    %878 = vmatpush1.bf16.msra.mxu0 0
    %879 = vmatprep.subr.bf16.mxu0 0
    %880 = vmatpush1.bf16.msra.mxu0 0
    %881 = vmatprep.subr.bf16.mxu0 0
    %882 = vmatpush1.bf16.msra.mxu0 0
    %883 = vmatprep.subr.bf16.mxu0 0
    %884 = vmatpush1.bf16.msra.mxu0 0
    %885 = vmatprep.subr.bf16.mxu0 0
    %886 = vmatpush1.bf16.msra.mxu0 0
    %887 = vmatprep.subr.bf16.mxu0 0
    %888 = vmatpush1.bf16.msra.mxu0 0
    %889 = vmatprep.mubr.bf16.mxu0 0
    %890 = vmatmul.mubr.bf16.gmra.mrb[0].mxu0 %v802
    %v891 = vpop.f32.mrb[0].mxu0
    %v892 = vadd.f32 %v807, %v891
    %v893 = vpop.f32.mrb[0].mxu0
    %v894 = vpop.f32.mrb[0].mxu0
    %v895 = vpop.f32.mrb[0].mxu0
    %896 = vdwg.mxu0
    %897 = vmax.xlane.f32.xlu0 %v892
    %v898 = vpop.xlane.xlu0 %897
    %v899 = vsub.f32 %v892, %v898
    %v900 = vmul.f32 %v899, 1.442695
    %v901 = vpow.pop %v900
    %902 = vadd.xlane.f32.xlu0 %v901
    %v903 = vpop.xlane.xlu0 %902
    %v904 = vlog2.pop %v903
    %v905 = vmul.f32 %v904, 0.6931472
    %v906 = vsub.f32 %v899, %v905
    %907 = vst [vmem:[#allocation10] sm:$0xff] %v906
    // Predicated region
    $region38: #{_run_full.1} parent=1 // pred_check
      _
    $region39: #{_run_full.1} parent=1 // pred_check_branch
      %909 = sbr.rel (0) target = $region41
    $region40: #{_run_full.1} parent=1 // pred_region
      %s911 = ssub.s32 128, 128
      %912 = vsyncadd [#allocation5], %s911
      %s914 = sshll.u32 [#allocation9], 4
      %s915 = int_to_ptr.vmem [resolvable:$true] %s914
      %917 = dma.vmem_to_hbm [thread:$0]  %s915, 128, %s6, [#allocation5]
    $region41: #{_run_full.1} parent=1 // pred_fallthru
      _
    // Predicated region
    $region42: #{_run_full.1} parent=1 // pred_check
      _
    $region43: #{_run_full.1} parent=1 // pred_check_branch
      %919 = sbr.rel (0) target = $region45
    $region44: #{_run_full.1} parent=1 // pred_region
      %s921 = ssub.s32 128, 128
      %922 = vsyncadd [#allocation11], %s921
      %s924 = sshll.u32 [#allocation10], 4
      %s925 = int_to_ptr.vmem [resolvable:$true] %s924
      %927 = dma.vmem_to_hbm [thread:$0]  %s925, 128, %s7, [#allocation11]
    $region45: #{_run_full.1} parent=1 // pred_fallthru
      _
    // Predicated region
    $region46: #{_run_full.1} parent=1 // pred_check
      _
    $region47: #{_run_full.1} parent=1 // pred_check_branch
      %929 = sbr.rel (0) target = $region49
    $region48: #{_run_full.1} parent=1 // pred_region
      %930 = dma.done [#allocation5], 128
    $region49: #{_run_full.1} parent=1 // pred_fallthru
      _
    // Predicated region
    $region50: #{_run_full.1} parent=1 // pred_check
      _
    $region51: #{_run_full.1} parent=1 // pred_check_branch
      %932 = sbr.rel (0) target = $region53
    $region52: #{_run_full.1} parent=1 // pred_region
      %933 = dma.done [#allocation11], 128
    $region53: #{_run_full.1} parent=1 // pred_fallthru
      _
    %934 = vsyncpa [#allocation4], 1
    %935 = vsyncpa [#allocation7], 1
    %936 = vsyncpa [#allocation5], 1
    %937 = vsyncpa [#allocation11], 1

</llo_original>
